<compile_context>
chip_gen: v6e
topology: v6e:2x2x1
jax: 0.10.0
libtpu: 0.0.40
codegen_flags: <defaults>
</compile_context>

<pallas_src>
import functools

import numpy as np
import jax
import jax.numpy as jnp
from jax.experimental import pallas as pl
from jax.experimental.pallas import tpu as pltpu


# ----------------------------------------------------------------------------
# Parameter / support construction (init-time glue, mirrors GConv.__init__)
# ----------------------------------------------------------------------------
def gaussian_basis_2d(x, y, sigma, max_ord):
    # TODO(synk): GaussianBasis2d source was not provided; approximate it with a
    # Hermite-Gaussian derivative basis of total order <= max_ord (order-0 first).
    def hermite(n, t):
        if n == 0:
            return np.ones_like(t)
        if n == 1:
            return 2.0 * t
        hm2, hm1 = np.ones_like(t), 2.0 * t
        for m in range(2, n + 1):
            hm2, hm1 = hm1, 2.0 * t * hm1 - 2.0 * (m - 1) * hm2
        return hm1

    g = np.exp(-(x ** 2 + y ** 2) / (2.0 * sigma ** 2))
    basis = []
    for total in range(max_ord + 1):
        for a in range(total + 1):
            b = total - a
            basis.append(hermite(a, x / sigma) * hermite(b, y / sigma) * g)
    return np.stack(basis, axis=0).astype(np.float32)  # (F, N2, K)


def compute_support(l1, l2, k):
    # brute-force KNN (replaces scipy KDTree; same sorted-by-distance result)
    d2 = np.sum((l2[:, None, :] - l1[None, :, :]) ** 2, axis=-1)
    order = np.argsort(d2, axis=-1, kind="stable")[:, :k]
    dists = np.sqrt(np.take_along_axis(d2, order, axis=-1)).astype(np.float32)
    idx = order.astype(np.int32)                               # (N2, K)
    patches = l1[idx] - l2[:, None, :]                         # (N2, K, 2)
    mean_d = np.mean(dists[:, 1:7], axis=-1)
    mean_d = np.maximum(mean_d, 1e-6)
    patches = (patches / mean_d[:, None, None]).astype(np.float32)
    return patches, idx


def compute_filter_weights(patches, sigma, max_ord):
    x, y = patches[..., 0], patches[..., 1]
    w = gaussian_basis_2d(x, y, sigma, max_ord)                # (F, N2, K)
    w0, wr = w[0], w[1:]
    wr = wr - wr.mean(axis=-1, keepdims=True)
    norm = np.maximum(np.sqrt((wr ** 2).sum(axis=-1, keepdims=True)), 1e-6)
    wr = wr / norm
    s = np.maximum(w0.sum(axis=-1, keepdims=True), 1e-6)
    w0 = w0 / s
    return np.concatenate([w0[None], wr], axis=0).astype(np.float32)


# ----------------------------------------------------------------------------
# Pallas kernel
# ----------------------------------------------------------------------------
def dwise_kernel(x_ref, oh_ref, filt_ref, o_ref, *, k, tn, c, rb):
    # x_ref    : (tr, N1)    f32/bf16 -- row tile (rb batches x C channels)
    # oh_ref   : (N1, K*tn)  f32/bf16 -- one-hot gather columns (K-major)
    # filt_ref : (C,  K*tn)  f32      -- batch-invariant mixed filters
    # o_ref    : (tr, tn)    f32      -- lane-dense output tile (tn % 128 == 0)
    tr = rb * c

    # Neighbour gather for the whole row tile in one MXU matmul.
    xg = jnp.dot(x_ref[...], oh_ref[...],
                 preferred_element_type=jnp.float32)            # (tr, K*tn)

    filt = filt_ref[...]                                        # (C, K*tn)

    if rb > 1:
        # Row r of this tile holds channel (r % C): build the (tr, C)
        # channel-selection matrix once and broadcast the batch-invariant
        # filters on-chip (no B-fold duplication in HBM or VMEM).
        row_ch = jax.lax.broadcasted_iota(jnp.int32, (tr, c), 0) % c
        col_ch = jax.lax.broadcasted_iota(jnp.int32, (tr, c), 1)
        sel = (row_ch == col_ch).astype(jnp.float32)            # (tr, C)

    # Fused multiply + k-reduction: K lane-aligned slice MACs, no (tr, K*tn)
    # product temporary.
    acc = None
    for j in range(k):
        f_j = filt[:, j * tn:(j + 1) * tn]                      # (C, tn)
        if rb > 1:
            f_j = jnp.dot(sel, f_j,
                          preferred_element_type=jnp.float32)   # (tr, tn)
        p = xg[:, j * tn:(j + 1) * tn] * f_j
        acc = p if acc is None else acc + p
    o_ref[...] = acc.astype(o_ref.dtype)


def _round_up(a, m):
    return (a + m - 1) // m * m


def _working_set_bytes(tr, c, n1, k, tn, in_isz):
    """Per-grid-step VMEM working set (double-buffered blocks + temporaries)."""
    x_blk = 2 * tr * n1 * in_isz            # x row tile
    oh_blk = 2 * n1 * k * tn * in_isz       # one-hot gather block (dominant)
    f_blk = 2 * c * k * tn * 4              # batch-invariant filters (f32)
    o_blk = 2 * tr * tn * 4                 # output tile
    temps = tr * k * tn * 4 + 3 * tr * tn * 4   # xg + acc / f_j temporaries
    return x_blk + oh_blk + f_blk + o_blk + temps


def dwise_forward(x, idx, filter_weights, weights, use_bf16=False):
    """x: (B, C, N1); idx: (N2, K) static int; filter_weights: (F, N2, K);
    weights: (C, F).  Returns (B, C, N2) float32.

    use_bf16: store x and the one-hot gather matrix in bfloat16 (halves the
    dominant HBM stream; one-hot 0/1 stays exact, x is rounded to bf16 so
    result precision drops to ~2^-9 relative).  Accumulation is f32 either way.
    """
    B, C, N1 = x.shape
    F, N2, K = filter_weights.shape
    idx_np = np.asarray(idx)
    BC = B * C
    in_isz = 2 if use_bf16 else 4
    in_dtype = jnp.bfloat16 if use_bf16 else jnp.float32

    # ---- row tiling over B*C (v7x megacore + smaller per-step x block) -----
    # Row tiles must align to batch boundaries (so the on-chip channel
    # broadcast of filt stays valid) and respect the sublane constraint
    # (multiple of 8, or the full dim).
    nrt = 1
    if B % 2 == 0 and ((B // 2) * C) % 8 == 0:
        nrt = 2
    tr = BC // nrt
    rb = tr // C                                               # batches per row tile

    # ---- generation-aware tn selection + explicit VMEM limit ---------------
    try:
        info = pltpu.get_tpu_info()
        vmem_cap = getattr(info, "vmem_capacity_bytes", None) or (64 << 20)
    except Exception:
        vmem_cap = 64 << 20                                    # v7x-conservative
    budget = int(vmem_cap * 0.75)

    n2_min = _round_up(N2, 128)
    tn = 128
    for cand in (512, 256, 128):                               # prefer wide, lane-dense tiles
        if cand > n2_min:
            continue
        if _working_set_bytes(tr, C, N1, K, cand, in_isz) <= budget:
            tn = cand
            break
    N2p = _round_up(N2, tn)
    nct = N2p // tn

    ws = _working_set_bytes(tr, C, N1, K, tn, in_isz)
    vmem_limit = min(int(vmem_cap * 0.95), ws + (8 << 20))
    vmem_limit = max(vmem_limit, 16 << 20)

    # ---- host-side constant: one-hot gather matrix (static support set) ----
    # oh[m, tile*K*tn + k*tn + n_local] = (idx[tile*tn + n_local, k] == m)
    oh = np.zeros((N1, N2p, K), dtype=np.float32)
    nn, kk = np.meshgrid(np.arange(N2), np.arange(K), indexing="ij")
    oh[idx_np, nn, kk] = 1.0
    oh = (oh.reshape(N1, nct, tn, K)
            .transpose(0, 1, 3, 2)
            .reshape(N1, nct * K * tn))

    # ---- batch-invariant filter mix, hoisted out of the kernel (XLA) -------
    fw = jnp.asarray(filter_weights, dtype=jnp.float32)
    w = jnp.asarray(weights, dtype=jnp.float32)
    filt = jnp.einsum("fnk,cf->cnk", fw, w)                    # (C, N2, K)
    filt = jnp.pad(filt, ((0, 0), (0, N2p - N2), (0, 0)))
    filt = (filt.reshape(C, nct, tn, K)
                .transpose(0, 1, 3, 2)
                .reshape(C, nct * K * tn))                     # no B-fold copy

    x2d = x.astype(in_dtype).reshape(BC, N1)
    oh_dev = jnp.asarray(oh, dtype=in_dtype)

    kernel = functools.partial(dwise_kernel, k=K, tn=tn, c=C, rb=rb)
    out = pl.pallas_call(
        kernel,
        out_shape=jax.ShapeDtypeStruct((BC, N2p), jnp.float32),
        grid=(nrt, nct),
        in_specs=[
            pl.BlockSpec((tr, N1), lambda i, j: (i, 0)),        # x row tile
            pl.BlockSpec((N1, K * tn), lambda i, j: (0, j)),    # one-hot gather
            pl.BlockSpec((C, K * tn), lambda i, j: (0, j)),     # mixed filters
        ],
        out_specs=pl.BlockSpec((tr, tn), lambda i, j: (i, j)),
        compiler_params=pltpu.CompilerParams(
            dimension_semantics=("parallel", "parallel"),
            vmem_limit_bytes=vmem_limit),
    )(x2d, oh_dev, filt)

    return out[:, :N2].reshape(B, C, N2)


# ----------------------------------------------------------------------------
if __name__ == "__main__":
    B, C = 2, 4
    K_NEIGH = 8
    SIGMA = 1.0
    MAX_ORD = 2

    # l1 / l2 point layouts: regular 8x8 grids -> N1 = N2 = 64
    g = np.arange(8, dtype=np.float32)
    yy, xx = np.meshgrid(g, g, indexing="ij")
    l1 = np.stack([xx.ravel(), yy.ravel()], axis=-1)          # (64, 2)
    l2 = l1.copy()                                            # (64, 2)

    patches, idx = compute_support(l1, l2, K_NEIGH)
    filter_weights = compute_filter_weights(patches, SIGMA, MAX_ORD)  # (F, N2, K)
    F = filter_weights.shape[0]
    N1, N2 = l1.shape[0], l2.shape[0]

    key = jax.random.PRNGKey(0)
    kw, kx = jax.random.split(key)
    # conv1x1 (groups=C) weight shape is (C, n_filters, 1); bias is never used
    # by DWise.forward, so it is omitted.
    weights = 0.1 * jax.random.normal(kw, (C, F), dtype=jnp.float32)
    x = jax.random.normal(kx, (B, C, N1), dtype=jnp.float32)

    # pure-JAX reference mirroring the PyTorch forward
    xg = x[:, :, jnp.asarray(idx)]                                        # (B,C,N2,K)
    filt_ref = jnp.einsum("fnk,cf->cnk", jnp.asarray(filter_weights), weights)
    ref = jnp.einsum("bcnk,cnk->bcn", xg, filt_ref)

    # f32 path: bit-for-tolerance equivalent to the reference
    out = jax.block_until_ready(dwise_forward(x, idx, filter_weights, weights))
    assert out.shape == (B, C, N2)
    np.testing.assert_allclose(np.asarray(out), np.asarray(ref), rtol=1e-4, atol=1e-4)

    # bf16 storage path: halves the dominant one-hot HBM stream; one-hot is
    # exact in bf16, x is rounded, so the tolerance is relaxed accordingly.
    out_bf16 = jax.block_until_ready(
        dwise_forward(x, idx, filter_weights, weights, use_bf16=True))
    np.testing.assert_allclose(np.asarray(out_bf16), np.asarray(ref),
                               rtol=2e-2, atol=2e-2)

    print("KERNEL_OK")
</pallas_src>

<mosaic_0001>
module attributes {stable_mosaic.version = 11 : i64} {
  func.func @dwise_kernel(%arg0: i32, %arg1: i32, %arg2: memref<8x64xf32, #tpu.memory_space<vmem>>, %arg3: memref<64x1024xf32, #tpu.memory_space<vmem>>, %arg4: memref<4x1024xf32, #tpu.memory_space<vmem>>, %arg5: memref<8x128xf32, #tpu.memory_space<vmem>>) attributes {dimension_semantics = [#tpu.dimension_semantics<parallel>, #tpu.dimension_semantics<parallel>], iteration_bounds = array<i64: 1, 1>, scalar_prefetch = 0 : i64, scratch_operands = 0 : i64, tpu.core_type = #tpu.core_type<tc>, window_params = [{transform_indices = @transform_0, window_bounds = array<i64: 8, 64>}, {transform_indices = @transform_1, window_bounds = array<i64: 64, 1024>}, {transform_indices = @transform_2, window_bounds = array<i64: 4, 1024>}, {transform_indices = @transform_3, window_bounds = array<i64: 8, 128>}]} {
    %c0 = arith.constant 0 : index
    %c0_0 = arith.constant 0 : index
    %0 = vector.load %arg2[%c0, %c0_0] : memref<8x64xf32, #tpu.memory_space<vmem>>, vector<8x64xf32>
    %c0_1 = arith.constant 0 : index
    %c0_2 = arith.constant 0 : index
    %1 = vector.load %arg3[%c0_1, %c0_2] : memref<64x1024xf32, #tpu.memory_space<vmem>>, vector<64x1024xf32>
    %cst = arith.constant dense<0.000000e+00> : vector<8x1024xf32>
    %2 = tpu.matmul %0, %1, %cst {dimension_numbers = #tpu.dot_dimension_numbers<[1], [0], [0], [1], [0, 0, 1, 1], [], []>} : vector<8x64xf32>, vector<64x1024xf32>, vector<8x1024xf32> -> vector<8x1024xf32>
    %c0_3 = arith.constant 0 : index
    %c0_4 = arith.constant 0 : index
    %3 = vector.load %arg4[%c0_3, %c0_4] : memref<4x1024xf32, #tpu.memory_space<vmem>>, vector<4x1024xf32>
    %4 = tpu.iota {dimensions = array<i32: 0>} : vector<8x4xi32>
    %c4_i32 = arith.constant 4 : i32
    %c0_i32 = arith.constant 0 : i32
    %5 = arith.cmpi eq, %c4_i32, %c0_i32 : i32
    %c1_i32 = arith.constant 1 : i32
    %6 = arith.select %5, %c1_i32, %c4_i32 : i32
    %7 = vector.broadcast %6 : i32 to vector<8x4xi32>
    %8 = arith.remsi %4, %7 : vector<8x4xi32>
    %c0_i32_5 = arith.constant 0 : i32
    %9 = vector.broadcast %c0_i32_5 : i32 to vector<8x4xi32>
    %10 = arith.cmpi ne, %8, %9 : vector<8x4xi32>
    %c0_i32_6 = arith.constant 0 : i32
    %11 = vector.broadcast %c0_i32_6 : i32 to vector<8x4xi32>
    %12 = arith.cmpi slt, %8, %11 : vector<8x4xi32>
    %c0_i32_7 = arith.constant 0 : i32
    %13 = arith.cmpi slt, %6, %c0_i32_7 : i32
    %14 = vector.broadcast %13 : i1 to vector<8x4xi1>
    %15 = vector.broadcast %14 : vector<8x4xi1> to vector<8x4xi1>
    %16 = arith.xori %12, %15 : vector<8x4xi1>
    %17 = arith.andi %16, %10 : vector<8x4xi1>
    %18 = vector.broadcast %6 : i32 to vector<8x4xi32>
    %19 = arith.addi %8, %18 : vector<8x4xi32>
    %20 = arith.select %17, %19, %8 : vector<8x4xi1>, vector<8x4xi32>
    %21 = tpu.iota {dimensions = array<i32: 1>} : vector<8x4xi32>
    %22 = arith.cmpi eq, %20, %21 : vector<8x4xi32>
    %23 = arith.extui %22 : vector<8x4xi1> to vector<8x4xi32>
    %24 = arith.sitofp %23 : vector<8x4xi32> to vector<8x4xf32>
    %25 = vector.extract_strided_slice %3 {offsets = [0, 0], sizes = [4, 128], strides = [1, 1]} : vector<4x1024xf32> to vector<4x128xf32>
    %cst_8 = arith.constant dense<0.000000e+00> : vector<8x128xf32>
    %26 = tpu.matmul %24, %25, %cst_8 {dimension_numbers = #tpu.dot_dimension_numbers<[1], [0], [0], [1], [0, 0, 1, 1], [], []>} : vector<8x4xf32>, vector<4x128xf32>, vector<8x128xf32> -> vector<8x128xf32>
    %27 = vector.extract_strided_slice %2 {offsets = [0, 0], sizes = [8, 128], strides = [1, 1]} : vector<8x1024xf32> to vector<8x128xf32>
    %28 = arith.mulf %27, %26 : vector<8x128xf32>
    %29 = vector.extract_strided_slice %3 {offsets = [0, 128], sizes = [4, 128], strides = [1, 1]} : vector<4x1024xf32> to vector<4x128xf32>
    %cst_9 = arith.constant dense<0.000000e+00> : vector<8x128xf32>
    %30 = tpu.matmul %24, %29, %cst_9 {dimension_numbers = #tpu.dot_dimension_numbers<[1], [0], [0], [1], [0, 0, 1, 1], [], []>} : vector<8x4xf32>, vector<4x128xf32>, vector<8x128xf32> -> vector<8x128xf32>
    %31 = vector.extract_strided_slice %2 {offsets = [0, 128], sizes = [8, 128], strides = [1, 1]} : vector<8x1024xf32> to vector<8x128xf32>
    %32 = arith.mulf %31, %30 : vector<8x128xf32>
    %33 = arith.addf %28, %32 : vector<8x128xf32>
    %34 = vector.extract_strided_slice %3 {offsets = [0, 256], sizes = [4, 128], strides = [1, 1]} : vector<4x1024xf32> to vector<4x128xf32>
    %cst_10 = arith.constant dense<0.000000e+00> : vector<8x128xf32>
    %35 = tpu.matmul %24, %34, %cst_10 {dimension_numbers = #tpu.dot_dimension_numbers<[1], [0], [0], [1], [0, 0, 1, 1], [], []>} : vector<8x4xf32>, vector<4x128xf32>, vector<8x128xf32> -> vector<8x128xf32>
    %36 = vector.extract_strided_slice %2 {offsets = [0, 256], sizes = [8, 128], strides = [1, 1]} : vector<8x1024xf32> to vector<8x128xf32>
    %37 = arith.mulf %36, %35 : vector<8x128xf32>
    %38 = arith.addf %33, %37 : vector<8x128xf32>
    %39 = vector.extract_strided_slice %3 {offsets = [0, 384], sizes = [4, 128], strides = [1, 1]} : vector<4x1024xf32> to vector<4x128xf32>
    %cst_11 = arith.constant dense<0.000000e+00> : vector<8x128xf32>
    %40 = tpu.matmul %24, %39, %cst_11 {dimension_numbers = #tpu.dot_dimension_numbers<[1], [0], [0], [1], [0, 0, 1, 1], [], []>} : vector<8x4xf32>, vector<4x128xf32>, vector<8x128xf32> -> vector<8x128xf32>
    %41 = vector.extract_strided_slice %2 {offsets = [0, 384], sizes = [8, 128], strides = [1, 1]} : vector<8x1024xf32> to vector<8x128xf32>
    %42 = arith.mulf %41, %40 : vector<8x128xf32>
    %43 = arith.addf %38, %42 : vector<8x128xf32>
    %44 = vector.extract_strided_slice %3 {offsets = [0, 512], sizes = [4, 128], strides = [1, 1]} : vector<4x1024xf32> to vector<4x128xf32>
    %cst_12 = arith.constant dense<0.000000e+00> : vector<8x128xf32>
    %45 = tpu.matmul %24, %44, %cst_12 {dimension_numbers = #tpu.dot_dimension_numbers<[1], [0], [0], [1], [0, 0, 1, 1], [], []>} : vector<8x4xf32>, vector<4x128xf32>, vector<8x128xf32> -> vector<8x128xf32>
    %46 = vector.extract_strided_slice %2 {offsets = [0, 512], sizes = [8, 128], strides = [1, 1]} : vector<8x1024xf32> to vector<8x128xf32>
    %47 = arith.mulf %46, %45 : vector<8x128xf32>
    %48 = arith.addf %43, %47 : vector<8x128xf32>
    %49 = vector.extract_strided_slice %3 {offsets = [0, 640], sizes = [4, 128], strides = [1, 1]} : vector<4x1024xf32> to vector<4x128xf32>
    %cst_13 = arith.constant dense<0.000000e+00> : vector<8x128xf32>
    %50 = tpu.matmul %24, %49, %cst_13 {dimension_numbers = #tpu.dot_dimension_numbers<[1], [0], [0], [1], [0, 0, 1, 1], [], []>} : vector<8x4xf32>, vector<4x128xf32>, vector<8x128xf32> -> vector<8x128xf32>
    %51 = vector.extract_strided_slice %2 {offsets = [0, 640], sizes = [8, 128], strides = [1, 1]} : vector<8x1024xf32> to vector<8x128xf32>
    %52 = arith.mulf %51, %50 : vector<8x128xf32>
    %53 = arith.addf %48, %52 : vector<8x128xf32>
    %54 = vector.extract_strided_slice %3 {offsets = [0, 768], sizes = [4, 128], strides = [1, 1]} : vector<4x1024xf32> to vector<4x128xf32>
    %cst_14 = arith.constant dense<0.000000e+00> : vector<8x128xf32>
    %55 = tpu.matmul %24, %54, %cst_14 {dimension_numbers = #tpu.dot_dimension_numbers<[1], [0], [0], [1], [0, 0, 1, 1], [], []>} : vector<8x4xf32>, vector<4x128xf32>, vector<8x128xf32> -> vector<8x128xf32>
    %56 = vector.extract_strided_slice %2 {offsets = [0, 768], sizes = [8, 128], strides = [1, 1]} : vector<8x1024xf32> to vector<8x128xf32>
    %57 = arith.mulf %56, %55 : vector<8x128xf32>
    %58 = arith.addf %53, %57 : vector<8x128xf32>
    %59 = vector.extract_strided_slice %3 {offsets = [0, 896], sizes = [4, 128], strides = [1, 1]} : vector<4x1024xf32> to vector<4x128xf32>
    %cst_15 = arith.constant dense<0.000000e+00> : vector<8x128xf32>
    %60 = tpu.matmul %24, %59, %cst_15 {dimension_numbers = #tpu.dot_dimension_numbers<[1], [0], [0], [1], [0, 0, 1, 1], [], []>} : vector<8x4xf32>, vector<4x128xf32>, vector<8x128xf32> -> vector<8x128xf32>
    %61 = vector.extract_strided_slice %2 {offsets = [0, 896], sizes = [8, 128], strides = [1, 1]} : vector<8x1024xf32> to vector<8x128xf32>
    %62 = arith.mulf %61, %60 : vector<8x128xf32>
    %63 = arith.addf %58, %62 : vector<8x128xf32>
    %c0_16 = arith.constant 0 : index
    %c0_17 = arith.constant 0 : index
    %64 = vector.load %arg5[%c0_16, %c0_17] : memref<8x128xf32, #tpu.memory_space<vmem>>, vector<8x128xf32>
    tpu.vector_store %arg5[%c0_16, %c0_17], %63 {strides = array<i32>} : memref<8x128xf32, #tpu.memory_space<vmem>>, vector<8x128xf32>,
    return
  }
  func.func @transform_0(%arg0: i32, %arg1: i32) -> (i32, i32) {
    %c0_i32 = arith.constant 0 : i32
    %c0_i32_0 = arith.constant 0 : i32
    return %arg0, %c0_i32 : i32, i32
  }
  func.func @transform_1(%arg0: i32, %arg1: i32) -> (i32, i32) {
    %c0_i32 = arith.constant 0 : i32
    %c0_i32_0 = arith.constant 0 : i32
    return %c0_i32, %arg1 : i32, i32
  }
  func.func @transform_2(%arg0: i32, %arg1: i32) -> (i32, i32) {
    %c0_i32 = arith.constant 0 : i32
    %c0_i32_0 = arith.constant 0 : i32
    return %c0_i32, %arg1 : i32, i32
  }
  func.func @transform_3(%arg0: i32, %arg1: i32) -> (i32, i32) {
    %c0_i32 = arith.constant 0 : i32
    return %arg0, %arg1 : i32, i32
  }
}

</mosaic_0001>

<llo_original>
// kernel: tpu_custom_call.1
$region0: #{tpu_custom_call.1}
  #allocation0 [shape = 'u32[]', space=smem, size = 0x4, offset = 0x4, fixed_abs, tag = 'smem constant byte address 0x4 - core index']
  #allocation1 [shape = 'u32[144,128]{1,0:T(1,128)}', space=vmem, size = 0x12000, scoped, tag = 'internal scratch']
  %s0 = inlined_call_operand.hbm [shape: f32[8,64], index: 0, kind: input, shape index: {}]
  %s1 = inlined_call_operand.hbm [shape: f32[64,1024], index: 1, kind: input, shape index: {}]
  %s2 = inlined_call_operand.hbm [shape: f32[4,1024], index: 2, kind: input, shape index: {}]
  %s3 = inlined_call_operand.hbm [shape: f32[8,128], index: 3, kind: output, shape index: {}]
  %s4 = sld [smem:[#allocation0]]
  $region34: #{tpu_custom_call.1} parent=0
    _
  %s6 = ssub.s32 1, %s4
  %s7 = scalar_select 0, %s6, %s4
  $region1: #{tpu_custom_call.1} parent=0
    #allocation2 [shape = 'u8[4096]{0}', space=vmem, size = 0x1000, scoped, tag = 'input window, operand 0, single buffered']
    #allocation3 [shape = 's32[1]{0}', space=sflag, size = 0x4, scoped, tag = 'scoped memory for tpu_custom_call.1']
    #allocation4 [shape = 's32[1]{0}', space=sflag, size = 0x4, scoped, tag = 'scoped memory for tpu_custom_call.1']
    #allocation5 [shape = 'u8[262144]{0}', space=vmem, size = 0x40000, scoped, tag = 'input window, operand 1, single buffered']
    #allocation6 [shape = 's32[1]{0}', space=sflag, size = 0x4, scoped, tag = 'scoped memory for tpu_custom_call.1']
    #allocation7 [shape = 'u8[16384]{0}', space=vmem, size = 0x4000, scoped, tag = 'input window, operand 2, single buffered']
    #allocation8 [shape = 'u8[4096]{0}', space=vmem, size = 0x1000, scoped, tag = 'output window, operand 0, single buffered']
    %8 = vsyncpa [#allocation3], 0
    %9 = vsyncpa [#allocation6], 0
    %10 = vsyncpa [#allocation4], 0
    // Predicated region
    $region2: #{tpu_custom_call.1} parent=1 // pred_check
      _
    $region3: #{tpu_custom_call.1} parent=1 // pred_check_branch
      %12 = sbr.rel (0) target = $region5
    $region4: #{tpu_custom_call.1} parent=1 // pred_region
      %s14 = ssub.s32 128, 128
      %15 = vsyncadd [#allocation3], %s14
      %s17 = sshll.u32 [#allocation2], 4
      %s18 = int_to_ptr.vmem [resolvable:$true] %s17
      %20 = dma.hbm_to_vmem [thread:$0]  %s0, 128, %s18, [#allocation3]
    $region5: #{tpu_custom_call.1} parent=1 // pred_fallthru
      _
    // Predicated region
    $region6: #{tpu_custom_call.1} parent=1 // pred_check
      _
    $region7: #{tpu_custom_call.1} parent=1 // pred_check_branch
      %22 = sbr.rel (0) target = $region9
    $region8: #{tpu_custom_call.1} parent=1 // pred_region
      %s24 = ssub.s32 8192, 8192
      %25 = vsyncadd [#allocation6], %s24
      %s26 = sshll.u32 [#allocation5], 4
      %s27 = int_to_ptr.vmem [resolvable:$true] %s26
      %32 = dma.hbm_to_vmem [thread:$0]  %s1, 8192, %s27, [#allocation6], 1024, 1024, 64
    $region9: #{tpu_custom_call.1} parent=1 // pred_fallthru
      _
    // Predicated region
    $region10: #{tpu_custom_call.1} parent=1 // pred_check
      _
    $region11: #{tpu_custom_call.1} parent=1 // pred_check_branch
      %34 = sbr.rel (0) target = $region13
    $region12: #{tpu_custom_call.1} parent=1 // pred_region
      %s36 = ssub.s32 512, 512
      %37 = vsyncadd [#allocation6], %s36
      %s39 = sshll.u32 [#allocation7], 4
      %s40 = int_to_ptr.vmem [resolvable:$true] %s39
      %42 = dma.hbm_to_vmem [thread:$0]  %s2, 512, %s40, [#allocation6]
    $region13: #{tpu_custom_call.1} parent=1 // pred_fallthru
      _
    // Predicated region
    $region14: #{tpu_custom_call.1} parent=1 // pred_check
      _
    $region15: #{tpu_custom_call.1} parent=1 // pred_check_branch
      %44 = sbr.rel (0) target = $region17
    $region16: #{tpu_custom_call.1} parent=1 // pred_region
      %45 = dma.done [#allocation3], 128
    $region17: #{tpu_custom_call.1} parent=1 // pred_fallthru
      _
    // Predicated region
    $region18: #{tpu_custom_call.1} parent=1 // pred_check
      _
    $region19: #{tpu_custom_call.1} parent=1 // pred_check_branch
      %47 = sbr.rel (0) target = $region21
    $region20: #{tpu_custom_call.1} parent=1 // pred_region
      %48 = dma.done [#allocation6], 8192
    $region21: #{tpu_custom_call.1} parent=1 // pred_fallthru
      _
    // Predicated region
    $region22: #{tpu_custom_call.1} parent=1 // pred_check
      _
    $region23: #{tpu_custom_call.1} parent=1 // pred_check_branch
      %50 = sbr.rel (0) target = $region25
    $region24: #{tpu_custom_call.1} parent=1 // pred_region
      %51 = dma.done [#allocation6], 512
    $region25: #{tpu_custom_call.1} parent=1 // pred_fallthru
      _
    %v52 = vld [vmem:[#allocation2] sm:$0xff]
    %v53 = vld [vmem:[#allocation5] sm:$0xff]
    %v54 = vld [vmem:[#allocation5 + $0x8] sm:$0xff]
    %v55 = vld [vmem:[#allocation5 + $0x10] sm:$0xff]
    %v56 = vld [vmem:[#allocation5 + $0x18] sm:$0xff]
    %v57 = vld [vmem:[#allocation5 + $0x20] sm:$0xff]
    %v58 = vld [vmem:[#allocation5 + $0x28] sm:$0xff]
    %v59 = vld [vmem:[#allocation5 + $0x30] sm:$0xff]
    %v60 = vld [vmem:[#allocation5 + $0x38] sm:$0xff]
    %v61 = vld [vmem:[#allocation5 + $0x40] sm:$0xff]
    %v62 = vld [vmem:[#allocation5 + $0x48] sm:$0xff]
    %v63 = vld [vmem:[#allocation5 + $0x50] sm:$0xff]
    %v64 = vld [vmem:[#allocation5 + $0x58] sm:$0xff]
    %v65 = vld [vmem:[#allocation5 + $0x60] sm:$0xff]
    %v66 = vld [vmem:[#allocation5 + $0x68] sm:$0xff]
    %v67 = vld [vmem:[#allocation5 + $0x70] sm:$0xff]
    %v68 = vld [vmem:[#allocation5 + $0x78] sm:$0xff]
    %v69 = vld [vmem:[#allocation5 + $0x80] sm:$0xff]
    %v70 = vld [vmem:[#allocation5 + $0x88] sm:$0xff]
    %v71 = vld [vmem:[#allocation5 + $0x90] sm:$0xff]
    %v72 = vld [vmem:[#allocation5 + $0x98] sm:$0xff]
    %v73 = vld [vmem:[#allocation5 + $0xa0] sm:$0xff]
    %v74 = vld [vmem:[#allocation5 + $0xa8] sm:$0xff]
    %v75 = vld [vmem:[#allocation5 + $0xb0] sm:$0xff]
    %v76 = vld [vmem:[#allocation5 + $0xb8] sm:$0xff]
    %v77 = vld [vmem:[#allocation5 + $0xc0] sm:$0xff]
    %v78 = vld [vmem:[#allocation5 + $0xc8] sm:$0xff]
    %v79 = vld [vmem:[#allocation5 + $0xd0] sm:$0xff]
    %v80 = vld [vmem:[#allocation5 + $0xd8] sm:$0xff]
    %v81 = vld [vmem:[#allocation5 + $0xe0] sm:$0xff]
    %v82 = vld [vmem:[#allocation5 + $0xe8] sm:$0xff]
    %v83 = vld [vmem:[#allocation5 + $0xf0] sm:$0xff]
    %v84 = vld [vmem:[#allocation5 + $0xf8] sm:$0xff]
    %v85 = vld [vmem:[#allocation5 + $0x100] sm:$0xff]
    %v86 = vld [vmem:[#allocation5 + $0x108] sm:$0xff]
    %v87 = vld [vmem:[#allocation5 + $0x110] sm:$0xff]
    %v88 = vld [vmem:[#allocation5 + $0x118] sm:$0xff]
    %v89 = vld [vmem:[#allocation5 + $0x120] sm:$0xff]
    %v90 = vld [vmem:[#allocation5 + $0x128] sm:$0xff]
    %v91 = vld [vmem:[#allocation5 + $0x130] sm:$0xff]
    %v92 = vld [vmem:[#allocation5 + $0x138] sm:$0xff]
    %v93 = vld [vmem:[#allocation5 + $0x140] sm:$0xff]
    %v94 = vld [vmem:[#allocation5 + $0x148] sm:$0xff]
    %v95 = vld [vmem:[#allocation5 + $0x150] sm:$0xff]
    %v96 = vld [vmem:[#allocation5 + $0x158] sm:$0xff]
    %v97 = vld [vmem:[#allocation5 + $0x160] sm:$0xff]
    %v98 = vld [vmem:[#allocation5 + $0x168] sm:$0xff]
    %v99 = vld [vmem:[#allocation5 + $0x170] sm:$0xff]
    %v100 = vld [vmem:[#allocation5 + $0x178] sm:$0xff]
    %v101 = vld [vmem:[#allocation5 + $0x180] sm:$0xff]
    %v102 = vld [vmem:[#allocation5 + $0x188] sm:$0xff]
    %v103 = vld [vmem:[#allocation5 + $0x190] sm:$0xff]
    %v104 = vld [vmem:[#allocation5 + $0x198] sm:$0xff]
    %v105 = vld [vmem:[#allocation5 + $0x1a0] sm:$0xff]
    %v106 = vld [vmem:[#allocation5 + $0x1a8] sm:$0xff]
    %v107 = vld [vmem:[#allocation5 + $0x1b0] sm:$0xff]
    %v108 = vld [vmem:[#allocation5 + $0x1b8] sm:$0xff]
    %v109 = vld [vmem:[#allocation5 + $0x1c0] sm:$0xff]
    %v110 = vld [vmem:[#allocation5 + $0x1c8] sm:$0xff]
    %v111 = vld [vmem:[#allocation5 + $0x1d0] sm:$0xff]
    %v112 = vld [vmem:[#allocation5 + $0x1d8] sm:$0xff]
    %v113 = vld [vmem:[#allocation5 + $0x1e0] sm:$0xff]
    %v114 = vld [vmem:[#allocation5 + $0x1e8] sm:$0xff]
    %v115 = vld [vmem:[#allocation5 + $0x1f0] sm:$0xff]
    %v116 = vld [vmem:[#allocation5 + $0x1f8] sm:$0xff]
    %vm117 = vcmask 523264
    %v119 = vsel %vm117, %v52, 0
    %121 = vmatprep.subr.mxu0 0.0
    %122 = vmatpush1.msra.mxu0 0.0
    %123 = vmatprep.subr.mxu0 0.0
    %124 = vmatpush1.msra.mxu0 0.0
    %125 = vmatprep.subr.mxu0 0.0
    %126 = vmatpush1.msra.mxu0 0.0
    %127 = vmatprep.subr.mxu0 0.0
    %128 = vmatpush1.msra.mxu0 0.0
    %129 = vmatprep.subr.mxu0 0.0
    %130 = vmatpush1.msra.mxu0 0.0
    %131 = vmatprep.subr.mxu0 0.0
    %132 = vmatpush1.msra.mxu0 0.0
    %133 = vmatprep.subr.mxu0 0.0
    %134 = vmatpush1.msra.mxu0 0.0
    %135 = vmatprep.subr.mxu0 0.0
    %136 = vmatpush1.msra.mxu0 0.0
    %137 = vmatprep.subr.mxu0 %v110
    %138 = vmatpush1.msra.mxu0 %v109
    %139 = vmatprep.subr.mxu0 %v102
    %140 = vmatpush1.msra.mxu0 %v101
    %141 = vmatprep.subr.mxu0 %v94
    %142 = vmatpush1.msra.mxu0 %v93
    %143 = vmatprep.subr.mxu0 %v86
    %144 = vmatpush1.msra.mxu0 %v85
    %145 = vmatprep.subr.mxu0 %v78
    %146 = vmatpush1.msra.mxu0 %v77
    %147 = vmatprep.subr.mxu0 %v70
    %148 = vmatpush1.msra.mxu0 %v69
    %149 = vmatprep.subr.mxu0 %v62
    %150 = vmatpush1.msra.mxu0 %v61
    %151 = vmatprep.subr.mxu0 %v54
    %152 = vmatpush1.msra.mxu0 %v53
    %153 = vmatprep.subr.mxu0 0.0
    %154 = vmatpush2.msra.mxu0 0.0
    %155 = vmatprep.subr.mxu0 0.0
    %156 = vmatpush2.msra.mxu0 0.0
    %157 = vmatprep.subr.mxu0 0.0
    %158 = vmatpush2.msra.mxu0 0.0
    %159 = vmatprep.subr.mxu0 0.0
    %160 = vmatpush2.msra.mxu0 0.0
    %161 = vmatprep.subr.mxu0 0.0
    %162 = vmatpush2.msra.mxu0 0.0
    %163 = vmatprep.subr.mxu0 0.0
    %164 = vmatpush2.msra.mxu0 0.0
    %165 = vmatprep.subr.mxu0 0.0
    %166 = vmatpush2.msra.mxu0 0.0
    %167 = vmatprep.subr.mxu0 0.0
    %168 = vmatpush2.msra.mxu0 0.0
    %169 = vmatprep.subr.mxu0 0.0
    %170 = vmatpush2.msra.mxu0 0.0
    %171 = vmatprep.subr.mxu0 0.0
    %172 = vmatpush2.msra.mxu0 0.0
    %173 = vmatprep.subr.mxu0 0.0
    %174 = vmatpush2.msra.mxu0 0.0
    %175 = vmatprep.subr.mxu0 0.0
    %176 = vmatpush2.msra.mxu0 0.0
    %177 = vmatprep.subr.mxu0 0.0
    %178 = vmatpush2.msra.mxu0 0.0
    %179 = vmatprep.subr.mxu0 0.0
    %180 = vmatpush2.msra.mxu0 0.0
    %181 = vmatprep.subr.mxu0 0.0
    %182 = vmatpush2.msra.mxu0 0.0
    %183 = vmatprep.subr.mxu0 0.0
    %184 = vmatpush2.msra.mxu0 0.0
    %185 = vmatprep.mubr.f32.mxu0 0.0
    %186 = vmatmul.mubr.f32.gmra.mxu0 %v119
    %v187 = vpop.f32.mrf.mxu0
    %v188 = vadd.f32 0.0, %v187
    %v189 = vpop.f32.mrf.mxu0
    %v190 = vadd.f32 0.0, %v189
    %191 = vdwg.mxu0
    %192 = vmatprep.subr.mxu0 0.0
    %193 = vmatpush1.msra.mxu0 0.0
    %194 = vmatprep.subr.mxu0 0.0
    %195 = vmatpush1.msra.mxu0 0.0
    %196 = vmatprep.subr.mxu0 0.0
    %197 = vmatpush1.msra.mxu0 0.0
    %198 = vmatprep.subr.mxu0 0.0
    %199 = vmatpush1.msra.mxu0 0.0
    %200 = vmatprep.subr.mxu0 0.0
    %201 = vmatpush1.msra.mxu0 0.0
    %202 = vmatprep.subr.mxu0 0.0
    %203 = vmatpush1.msra.mxu0 0.0
    %204 = vmatprep.subr.mxu0 0.0
    %205 = vmatpush1.msra.mxu0 0.0
    %206 = vmatprep.subr.mxu0 0.0
    %207 = vmatpush1.msra.mxu0 0.0
    %208 = vmatprep.subr.mxu0 %v112
    %209 = vmatpush1.msra.mxu0 %v111
    %210 = vmatprep.subr.mxu0 %v104
    %211 = vmatpush1.msra.mxu0 %v103
    %212 = vmatprep.subr.mxu0 %v96
    %213 = vmatpush1.msra.mxu0 %v95
    %214 = vmatprep.subr.mxu0 %v88
    %215 = vmatpush1.msra.mxu0 %v87
    %216 = vmatprep.subr.mxu0 %v80
    %217 = vmatpush1.msra.mxu0 %v79
    %218 = vmatprep.subr.mxu0 %v72
    %219 = vmatpush1.msra.mxu0 %v71
    %220 = vmatprep.subr.mxu0 %v64
    %221 = vmatpush1.msra.mxu0 %v63
    %222 = vmatprep.subr.mxu0 %v56
    %223 = vmatpush1.msra.mxu0 %v55
    %224 = vmatprep.subr.mxu0 0.0
    %225 = vmatpush2.msra.mxu0 0.0
    %226 = vmatprep.subr.mxu0 0.0
    %227 = vmatpush2.msra.mxu0 0.0
    %228 = vmatprep.subr.mxu0 0.0
    %229 = vmatpush2.msra.mxu0 0.0
    %230 = vmatprep.subr.mxu0 0.0
    %231 = vmatpush2.msra.mxu0 0.0
    %232 = vmatprep.subr.mxu0 0.0
    %233 = vmatpush2.msra.mxu0 0.0
    %234 = vmatprep.subr.mxu0 0.0
    %235 = vmatpush2.msra.mxu0 0.0
    %236 = vmatprep.subr.mxu0 0.0
    %237 = vmatpush2.msra.mxu0 0.0
    %238 = vmatprep.subr.mxu0 0.0
    %239 = vmatpush2.msra.mxu0 0.0
    %240 = vmatprep.subr.mxu0 0.0
    %241 = vmatpush2.msra.mxu0 0.0
    %242 = vmatprep.subr.mxu0 0.0
    %243 = vmatpush2.msra.mxu0 0.0
    %244 = vmatprep.subr.mxu0 0.0
    %245 = vmatpush2.msra.mxu0 0.0
    %246 = vmatprep.subr.mxu0 0.0
    %247 = vmatpush2.msra.mxu0 0.0
    %248 = vmatprep.subr.mxu0 0.0
    %249 = vmatpush2.msra.mxu0 0.0
    %250 = vmatprep.subr.mxu0 0.0
    %251 = vmatpush2.msra.mxu0 0.0
    %252 = vmatprep.subr.mxu0 0.0
    %253 = vmatpush2.msra.mxu0 0.0
    %254 = vmatprep.subr.mxu0 0.0
    %255 = vmatpush2.msra.mxu0 0.0
    %256 = vmatprep.mubr.f32.mxu0 0.0
    %257 = vmatmul.mubr.f32.gmra.mxu0 %v119
    %v258 = vpop.f32.mrf.mxu0
    %v259 = vadd.f32 0.0, %v258
    %v260 = vpop.f32.mrf.mxu0
    %v261 = vadd.f32 0.0, %v260
    %262 = vdwg.mxu0
    %263 = vmatprep.subr.mxu0 0.0
    %264 = vmatpush1.msra.mxu0 0.0
    %265 = vmatprep.subr.mxu0 0.0
    %266 = vmatpush1.msra.mxu0 0.0
    %267 = vmatprep.subr.mxu0 0.0
    %268 = vmatpush1.msra.mxu0 0.0
    %269 = vmatprep.subr.mxu0 0.0
    %270 = vmatpush1.msra.mxu0 0.0
    %271 = vmatprep.subr.mxu0 0.0
    %272 = vmatpush1.msra.mxu0 0.0
    %273 = vmatprep.subr.mxu0 0.0
    %274 = vmatpush1.msra.mxu0 0.0
    %275 = vmatprep.subr.mxu0 0.0
    %276 = vmatpush1.msra.mxu0 0.0
    %277 = vmatprep.subr.mxu0 0.0
    %278 = vmatpush1.msra.mxu0 0.0
    %279 = vmatprep.subr.mxu0 %v114
    %280 = vmatpush1.msra.mxu0 %v113
    %281 = vmatprep.subr.mxu0 %v106
    %282 = vmatpush1.msra.mxu0 %v105
    %283 = vmatprep.subr.mxu0 %v98
    %284 = vmatpush1.msra.mxu0 %v97
    %285 = vmatprep.subr.mxu0 %v90
    %286 = vmatpush1.msra.mxu0 %v89
    %287 = vmatprep.subr.mxu0 %v82
    %288 = vmatpush1.msra.mxu0 %v81
    %289 = vmatprep.subr.mxu0 %v74
    %290 = vmatpush1.msra.mxu0 %v73
    %291 = vmatprep.subr.mxu0 %v66
    %292 = vmatpush1.msra.mxu0 %v65
    %293 = vmatprep.subr.mxu0 %v58
    %294 = vmatpush1.msra.mxu0 %v57
    %295 = vmatprep.subr.mxu0 0.0
    %296 = vmatpush2.msra.mxu0 0.0
    %297 = vmatprep.subr.mxu0 0.0
    %298 = vmatpush2.msra.mxu0 0.0
    %299 = vmatprep.subr.mxu0 0.0
    %300 = vmatpush2.msra.mxu0 0.0
    %301 = vmatprep.subr.mxu0 0.0
    %302 = vmatpush2.msra.mxu0 0.0
    %303 = vmatprep.subr.mxu0 0.0
    %304 = vmatpush2.msra.mxu0 0.0
    %305 = vmatprep.subr.mxu0 0.0
    %306 = vmatpush2.msra.mxu0 0.0
    %307 = vmatprep.subr.mxu0 0.0
    %308 = vmatpush2.msra.mxu0 0.0
    %309 = vmatprep.subr.mxu0 0.0
    %310 = vmatpush2.msra.mxu0 0.0
    %311 = vmatprep.subr.mxu0 0.0
    %312 = vmatpush2.msra.mxu0 0.0
    %313 = vmatprep.subr.mxu0 0.0
    %314 = vmatpush2.msra.mxu0 0.0
    %315 = vmatprep.subr.mxu0 0.0
    %316 = vmatpush2.msra.mxu0 0.0
    %317 = vmatprep.subr.mxu0 0.0
    %318 = vmatpush2.msra.mxu0 0.0
    %319 = vmatprep.subr.mxu0 0.0
    %320 = vmatpush2.msra.mxu0 0.0
    %321 = vmatprep.subr.mxu0 0.0
    %322 = vmatpush2.msra.mxu0 0.0
    %323 = vmatprep.subr.mxu0 0.0
    %324 = vmatpush2.msra.mxu0 0.0
    %325 = vmatprep.subr.mxu0 0.0
    %326 = vmatpush2.msra.mxu0 0.0
    %327 = vmatprep.mubr.f32.mxu0 0.0
    %328 = vmatmul.mubr.f32.gmra.mxu0 %v119
    %v329 = vpop.f32.mrf.mxu0
    %v330 = vadd.f32 0.0, %v329
    %v331 = vpop.f32.mrf.mxu0
    %v332 = vadd.f32 0.0, %v331
    %333 = vdwg.mxu0
    %334 = vmatprep.subr.mxu0 0.0
    %335 = vmatpush1.msra.mxu0 0.0
    %336 = vmatprep.subr.mxu0 0.0
    %337 = vmatpush1.msra.mxu0 0.0
    %338 = vmatprep.subr.mxu0 0.0
    %339 = vmatpush1.msra.mxu0 0.0
    %340 = vmatprep.subr.mxu0 0.0
    %341 = vmatpush1.msra.mxu0 0.0
    %342 = vmatprep.subr.mxu0 0.0
    %343 = vmatpush1.msra.mxu0 0.0
    %344 = vmatprep.subr.mxu0 0.0
    %345 = vmatpush1.msra.mxu0 0.0
    %346 = vmatprep.subr.mxu0 0.0
    %347 = vmatpush1.msra.mxu0 0.0
    %348 = vmatprep.subr.mxu0 0.0
    %349 = vmatpush1.msra.mxu0 0.0
    %350 = vmatprep.subr.mxu0 %v116
    %351 = vmatpush1.msra.mxu0 %v115
    %352 = vmatprep.subr.mxu0 %v108
    %353 = vmatpush1.msra.mxu0 %v107
    %354 = vmatprep.subr.mxu0 %v100
    %355 = vmatpush1.msra.mxu0 %v99
    %356 = vmatprep.subr.mxu0 %v92
    %357 = vmatpush1.msra.mxu0 %v91
    %358 = vmatprep.subr.mxu0 %v84
    %359 = vmatpush1.msra.mxu0 %v83
    %360 = vmatprep.subr.mxu0 %v76
    %361 = vmatpush1.msra.mxu0 %v75
    %362 = vmatprep.subr.mxu0 %v68
    %363 = vmatpush1.msra.mxu0 %v67
    %364 = vmatprep.subr.mxu0 %v60
    %365 = vmatpush1.msra.mxu0 %v59
    %366 = vmatprep.subr.mxu0 0.0
    %367 = vmatpush2.msra.mxu0 0.0
    %368 = vmatprep.subr.mxu0 0.0
    %369 = vmatpush2.msra.mxu0 0.0
    %370 = vmatprep.subr.mxu0 0.0
    %371 = vmatpush2.msra.mxu0 0.0
    %372 = vmatprep.subr.mxu0 0.0
    %373 = vmatpush2.msra.mxu0 0.0
    %374 = vmatprep.subr.mxu0 0.0
    %375 = vmatpush2.msra.mxu0 0.0
    %376 = vmatprep.subr.mxu0 0.0
    %377 = vmatpush2.msra.mxu0 0.0
    %378 = vmatprep.subr.mxu0 0.0
    %379 = vmatpush2.msra.mxu0 0.0
    %380 = vmatprep.subr.mxu0 0.0
    %381 = vmatpush2.msra.mxu0 0.0
    %382 = vmatprep.subr.mxu0 0.0
    %383 = vmatpush2.msra.mxu0 0.0
    %384 = vmatprep.subr.mxu0 0.0
    %385 = vmatpush2.msra.mxu0 0.0
    %386 = vmatprep.subr.mxu0 0.0
    %387 = vmatpush2.msra.mxu0 0.0
    %388 = vmatprep.subr.mxu0 0.0
    %389 = vmatpush2.msra.mxu0 0.0
    %390 = vmatprep.subr.mxu0 0.0
    %391 = vmatpush2.msra.mxu0 0.0
    %392 = vmatprep.subr.mxu0 0.0
    %393 = vmatpush2.msra.mxu0 0.0
    %394 = vmatprep.subr.mxu0 0.0
    %395 = vmatpush2.msra.mxu0 0.0
    %396 = vmatprep.subr.mxu0 0.0
    %397 = vmatpush2.msra.mxu0 0.0
    %398 = vmatprep.mubr.f32.mxu0 0.0
    %399 = vmatmul.mubr.f32.gmra.mxu0 %v119
    %v400 = vpop.f32.mrf.mxu0
    %v401 = vadd.f32 0.0, %v400
    %v402 = vpop.f32.mrf.mxu0
    %v403 = vadd.f32 0.0, %v402
    %404 = vdwg.mxu0
    %v405 = vld [vmem:[#allocation7] sm:$0xff]
    %v406 = vld [vmem:[#allocation7 + $0x8] sm:$0xff]
    %v407 = vld [vmem:[#allocation7 + $0x10] sm:$0xff]
    %v408 = vld [vmem:[#allocation7 + $0x18] sm:$0xff]
    %v409 = vlaneseq
    %v410 = vshrl.u32 %v409, 7
    %vm411 = vcmp.lt.s32.totalorder %v410, 0
    %v412 = vsub.s32 0, %v410
    %v413 = vsel %vm411, %v412, %v410
    %v414 = vshrl.u32 %v413, 2
    %v415 = vand.u32 %v413, 3
    %v416 = vsub.s32 0, %v415
    %v417 = vsel %vm411, %v416, %v415
    %vm418 = vcmp.ne.s32.totalorder %v417, 0
    %vm419 = vcmp.lt.s32.totalorder %v417, 0
    %vm420 = vmand %vm419, %vm418
    %v421 = vadd.s32 %v417, 4
    %v422 = vsel %vm420, %v421, %v417
    %v423 = vlaneseq
    %v424 = vand.u32 %v423, 127
    %vm425 = vcmp.eq.s32.totalorder %v422, %v424
    %v426 = vsel %vm425, 1, 0
    %v427 = vcvt.s32.f32 %v426
    %vm428 = vcmask 31744
    %v430 = vsel %vm428, %v427, 0
    %vm432 = vcmask 1043456
    %v434 = vsel %vm432, %v405, 0
    %436 = vmatprep.subr.mxu0 0.0
    %437 = vmatpush1.msra.mxu0 0.0
    %438 = vmatprep.subr.mxu0 0.0
    %439 = vmatpush1.msra.mxu0 0.0
    %440 = vmatprep.subr.mxu0 0.0
    %441 = vmatpush1.msra.mxu0 0.0
    %442 = vmatprep.subr.mxu0 0.0
    %443 = vmatpush1.msra.mxu0 0.0
    %444 = vmatprep.subr.mxu0 0.0
    %445 = vmatpush1.msra.mxu0 0.0
    %446 = vmatprep.subr.mxu0 0.0
    %447 = vmatpush1.msra.mxu0 0.0
    %448 = vmatprep.subr.mxu0 0.0
    %449 = vmatpush1.msra.mxu0 0.0
    %450 = vmatprep.subr.mxu0 0.0
    %451 = vmatpush1.msra.mxu0 0.0
    %452 = vmatprep.subr.mxu0 0.0
    %453 = vmatpush1.msra.mxu0 0.0
    %454 = vmatprep.subr.mxu0 0.0
    %455 = vmatpush1.msra.mxu0 0.0
    %456 = vmatprep.subr.mxu0 0.0
    %457 = vmatpush1.msra.mxu0 0.0
    %458 = vmatprep.subr.mxu0 0.0
    %459 = vmatpush1.msra.mxu0 0.0
    %460 = vmatprep.subr.mxu0 0.0
    %461 = vmatpush1.msra.mxu0 0.0
    %462 = vmatprep.subr.mxu0 0.0
    %463 = vmatpush1.msra.mxu0 0.0
    %464 = vmatprep.subr.mxu0 0.0
    %465 = vmatpush1.msra.mxu0 0.0
    %466 = vmatprep.subr.mxu0 0.0
    %467 = vmatpush1.msra.mxu0 %v434
    %468 = vmatprep.subr.mxu0 0.0
    %469 = vmatpush2.msra.mxu0 0.0
    %470 = vmatprep.subr.mxu0 0.0
    %471 = vmatpush2.msra.mxu0 0.0
    %472 = vmatprep.subr.mxu0 0.0
    %473 = vmatpush2.msra.mxu0 0.0
    %474 = vmatprep.subr.mxu0 0.0
    %475 = vmatpush2.msra.mxu0 0.0
    %476 = vmatprep.subr.mxu0 0.0
    %477 = vmatpush2.msra.mxu0 0.0
    %478 = vmatprep.subr.mxu0 0.0
    %479 = vmatpush2.msra.mxu0 0.0
    %480 = vmatprep.subr.mxu0 0.0
    %481 = vmatpush2.msra.mxu0 0.0
    %482 = vmatprep.subr.mxu0 0.0
    %483 = vmatpush2.msra.mxu0 0.0
    %484 = vmatprep.subr.mxu0 0.0
    %485 = vmatpush2.msra.mxu0 0.0
    %486 = vmatprep.subr.mxu0 0.0
    %487 = vmatpush2.msra.mxu0 0.0
    %488 = vmatprep.subr.mxu0 0.0
    %489 = vmatpush2.msra.mxu0 0.0
    %490 = vmatprep.subr.mxu0 0.0
    %491 = vmatpush2.msra.mxu0 0.0
    %492 = vmatprep.subr.mxu0 0.0
    %493 = vmatpush2.msra.mxu0 0.0
    %494 = vmatprep.subr.mxu0 0.0
    %495 = vmatpush2.msra.mxu0 0.0
    %496 = vmatprep.subr.mxu0 0.0
    %497 = vmatpush2.msra.mxu0 0.0
    %498 = vmatprep.subr.mxu0 0.0
    %499 = vmatpush2.msra.mxu0 0.0
    %500 = vmatprep.mubr.f32.mxu0 0.0
    %501 = vmatmul.mubr.f32.gmra.mxu0 %v430
    %v502 = vpop.f32.mrf.mxu0
    %v503 = vadd.f32 0.0, %v502
    %v504 = vpop.f32.mrf.mxu0
    %505 = vdwg.mxu0
    %v506 = vmul.f32 %v188, %v503
    %v507 = vcombine.high %v405, %v405
    %v508 = vsel %vm432, %v507, 0
    %510 = vmatprep.subr.mxu0 0.0
    %511 = vmatpush1.msra.mxu0 0.0
    %512 = vmatprep.subr.mxu0 0.0
    %513 = vmatpush1.msra.mxu0 0.0
    %514 = vmatprep.subr.mxu0 0.0
    %515 = vmatpush1.msra.mxu0 0.0
    %516 = vmatprep.subr.mxu0 0.0
    %517 = vmatpush1.msra.mxu0 0.0
    %518 = vmatprep.subr.mxu0 0.0
    %519 = vmatpush1.msra.mxu0 0.0
    %520 = vmatprep.subr.mxu0 0.0
    %521 = vmatpush1.msra.mxu0 0.0
    %522 = vmatprep.subr.mxu0 0.0
    %523 = vmatpush1.msra.mxu0 0.0
    %524 = vmatprep.subr.mxu0 0.0
    %525 = vmatpush1.msra.mxu0 0.0
    %526 = vmatprep.subr.mxu0 0.0
    %527 = vmatpush1.msra.mxu0 0.0
    %528 = vmatprep.subr.mxu0 0.0
    %529 = vmatpush1.msra.mxu0 0.0
    %530 = vmatprep.subr.mxu0 0.0
    %531 = vmatpush1.msra.mxu0 0.0
    %532 = vmatprep.subr.mxu0 0.0
    %533 = vmatpush1.msra.mxu0 0.0
    %534 = vmatprep.subr.mxu0 0.0
    %535 = vmatpush1.msra.mxu0 0.0
    %536 = vmatprep.subr.mxu0 0.0
    %537 = vmatpush1.msra.mxu0 0.0
    %538 = vmatprep.subr.mxu0 0.0
    %539 = vmatpush1.msra.mxu0 0.0
    %540 = vmatprep.subr.mxu0 0.0
    %541 = vmatpush1.msra.mxu0 %v508
    %542 = vmatprep.subr.mxu0 0.0
    %543 = vmatpush2.msra.mxu0 0.0
    %544 = vmatprep.subr.mxu0 0.0
    %545 = vmatpush2.msra.mxu0 0.0
    %546 = vmatprep.subr.mxu0 0.0
    %547 = vmatpush2.msra.mxu0 0.0
    %548 = vmatprep.subr.mxu0 0.0
    %549 = vmatpush2.msra.mxu0 0.0
    %550 = vmatprep.subr.mxu0 0.0
    %551 = vmatpush2.msra.mxu0 0.0
    %552 = vmatprep.subr.mxu0 0.0
    %553 = vmatpush2.msra.mxu0 0.0
    %554 = vmatprep.subr.mxu0 0.0
    %555 = vmatpush2.msra.mxu0 0.0
    %556 = vmatprep.subr.mxu0 0.0
    %557 = vmatpush2.msra.mxu0 0.0
    %558 = vmatprep.subr.mxu0 0.0
    %559 = vmatpush2.msra.mxu0 0.0
    %560 = vmatprep.subr.mxu0 0.0
    %561 = vmatpush2.msra.mxu0 0.0
    %562 = vmatprep.subr.mxu0 0.0
    %563 = vmatpush2.msra.mxu0 0.0
    %564 = vmatprep.subr.mxu0 0.0
    %565 = vmatpush2.msra.mxu0 0.0
    %566 = vmatprep.subr.mxu0 0.0
    %567 = vmatpush2.msra.mxu0 0.0
    %568 = vmatprep.subr.mxu0 0.0
    %569 = vmatpush2.msra.mxu0 0.0
    %570 = vmatprep.subr.mxu0 0.0
    %571 = vmatpush2.msra.mxu0 0.0
    %572 = vmatprep.subr.mxu0 0.0
    %573 = vmatpush2.msra.mxu0 0.0
    %574 = vmatprep.mubr.f32.mxu0 0.0
    %575 = vmatmul.mubr.f32.gmra.mxu0 %v430
    %v576 = vpop.f32.mrf.mxu0
    %v577 = vadd.f32 0.0, %v576
    %v578 = vpop.f32.mrf.mxu0
    %579 = vdwg.mxu0
    %v580 = vmul.f32 %v190, %v577
    %v581 = vadd.f32 %v506, %v580
    %v583 = vsel %vm432, %v406, 0
    %585 = vmatprep.subr.mxu0 0.0
    %586 = vmatpush1.msra.mxu0 0.0
    %587 = vmatprep.subr.mxu0 0.0
    %588 = vmatpush1.msra.mxu0 0.0
    %589 = vmatprep.subr.mxu0 0.0
    %590 = vmatpush1.msra.mxu0 0.0
    %591 = vmatprep.subr.mxu0 0.0
    %592 = vmatpush1.msra.mxu0 0.0
    %593 = vmatprep.subr.mxu0 0.0
    %594 = vmatpush1.msra.mxu0 0.0
    %595 = vmatprep.subr.mxu0 0.0
    %596 = vmatpush1.msra.mxu0 0.0
    %597 = vmatprep.subr.mxu0 0.0
    %598 = vmatpush1.msra.mxu0 0.0
    %599 = vmatprep.subr.mxu0 0.0
    %600 = vmatpush1.msra.mxu0 0.0
    %601 = vmatprep.subr.mxu0 0.0
    %602 = vmatpush1.msra.mxu0 0.0
    %603 = vmatprep.subr.mxu0 0.0
    %604 = vmatpush1.msra.mxu0 0.0
    %605 = vmatprep.subr.mxu0 0.0
    %606 = vmatpush1.msra.mxu0 0.0
    %607 = vmatprep.subr.mxu0 0.0
    %608 = vmatpush1.msra.mxu0 0.0
    %609 = vmatprep.subr.mxu0 0.0
    %610 = vmatpush1.msra.mxu0 0.0
    %611 = vmatprep.subr.mxu0 0.0
    %612 = vmatpush1.msra.mxu0 0.0
    %613 = vmatprep.subr.mxu0 0.0
    %614 = vmatpush1.msra.mxu0 0.0
    %615 = vmatprep.subr.mxu0 0.0
    %616 = vmatpush1.msra.mxu0 %v583
    %617 = vmatprep.subr.mxu0 0.0
    %618 = vmatpush2.msra.mxu0 0.0
    %619 = vmatprep.subr.mxu0 0.0
    %620 = vmatpush2.msra.mxu0 0.0
    %621 = vmatprep.subr.mxu0 0.0
    %622 = vmatpush2.msra.mxu0 0.0
    %623 = vmatprep.subr.mxu0 0.0
    %624 = vmatpush2.msra.mxu0 0.0
    %625 = vmatprep.subr.mxu0 0.0
    %626 = vmatpush2.msra.mxu0 0.0
    %627 = vmatprep.subr.mxu0 0.0
    %628 = vmatpush2.msra.mxu0 0.0
    %629 = vmatprep.subr.mxu0 0.0
    %630 = vmatpush2.msra.mxu0 0.0
    %631 = vmatprep.subr.mxu0 0.0
    %632 = vmatpush2.msra.mxu0 0.0
    %633 = vmatprep.subr.mxu0 0.0
    %634 = vmatpush2.msra.mxu0 0.0
    %635 = vmatprep.subr.mxu0 0.0
    %636 = vmatpush2.msra.mxu0 0.0
    %637 = vmatprep.subr.mxu0 0.0
    %638 = vmatpush2.msra.mxu0 0.0
    %639 = vmatprep.subr.mxu0 0.0
    %640 = vmatpush2.msra.mxu0 0.0
    %641 = vmatprep.subr.mxu0 0.0
    %642 = vmatpush2.msra.mxu0 0.0
    %643 = vmatprep.subr.mxu0 0.0
    %644 = vmatpush2.msra.mxu0 0.0
    %645 = vmatprep.subr.mxu0 0.0
    %646 = vmatpush2.msra.mxu0 0.0
    %647 = vmatprep.subr.mxu0 0.0
    %648 = vmatpush2.msra.mxu0 0.0
    %649 = vmatprep.mubr.f32.mxu0 0.0
    %650 = vmatmul.mubr.f32.gmra.mxu0 %v430
    %v651 = vpop.f32.mrf.mxu0
    %v652 = vadd.f32 0.0, %v651
    %v653 = vpop.f32.mrf.mxu0
    %654 = vdwg.mxu0
    %v655 = vmul.f32 %v259, %v652
    %v656 = vadd.f32 %v581, %v655
    %v657 = vcombine.high %v406, %v406
    %v658 = vsel %vm432, %v657, 0
    %660 = vmatprep.subr.mxu0 0.0
    %661 = vmatpush1.msra.mxu0 0.0
    %662 = vmatprep.subr.mxu0 0.0
    %663 = vmatpush1.msra.mxu0 0.0
    %664 = vmatprep.subr.mxu0 0.0
    %665 = vmatpush1.msra.mxu0 0.0
    %666 = vmatprep.subr.mxu0 0.0
    %667 = vmatpush1.msra.mxu0 0.0
    %668 = vmatprep.subr.mxu0 0.0
    %669 = vmatpush1.msra.mxu0 0.0
    %670 = vmatprep.subr.mxu0 0.0
    %671 = vmatpush1.msra.mxu0 0.0
    %672 = vmatprep.subr.mxu0 0.0
    %673 = vmatpush1.msra.mxu0 0.0
    %674 = vmatprep.subr.mxu0 0.0
    %675 = vmatpush1.msra.mxu0 0.0
    %676 = vmatprep.subr.mxu0 0.0
    %677 = vmatpush1.msra.mxu0 0.0
    %678 = vmatprep.subr.mxu0 0.0
    %679 = vmatpush1.msra.mxu0 0.0
    %680 = vmatprep.subr.mxu0 0.0
    %681 = vmatpush1.msra.mxu0 0.0
    %682 = vmatprep.subr.mxu0 0.0
    %683 = vmatpush1.msra.mxu0 0.0
    %684 = vmatprep.subr.mxu0 0.0
    %685 = vmatpush1.msra.mxu0 0.0
    %686 = vmatprep.subr.mxu0 0.0
    %687 = vmatpush1.msra.mxu0 0.0
    %688 = vmatprep.subr.mxu0 0.0
    %689 = vmatpush1.msra.mxu0 0.0
    %690 = vmatprep.subr.mxu0 0.0
    %691 = vmatpush1.msra.mxu0 %v658
    %692 = vmatprep.subr.mxu0 0.0
    %693 = vmatpush2.msra.mxu0 0.0
    %694 = vmatprep.subr.mxu0 0.0
    %695 = vmatpush2.msra.mxu0 0.0
    %696 = vmatprep.subr.mxu0 0.0
    %697 = vmatpush2.msra.mxu0 0.0
    %698 = vmatprep.subr.mxu0 0.0
    %699 = vmatpush2.msra.mxu0 0.0
    %700 = vmatprep.subr.mxu0 0.0
    %701 = vmatpush2.msra.mxu0 0.0
    %702 = vmatprep.subr.mxu0 0.0
    %703 = vmatpush2.msra.mxu0 0.0
    %704 = vmatprep.subr.mxu0 0.0
    %705 = vmatpush2.msra.mxu0 0.0
    %706 = vmatprep.subr.mxu0 0.0
    %707 = vmatpush2.msra.mxu0 0.0
    %708 = vmatprep.subr.mxu0 0.0
    %709 = vmatpush2.msra.mxu0 0.0
    %710 = vmatprep.subr.mxu0 0.0
    %711 = vmatpush2.msra.mxu0 0.0
    %712 = vmatprep.subr.mxu0 0.0
    %713 = vmatpush2.msra.mxu0 0.0
    %714 = vmatprep.subr.mxu0 0.0
    %715 = vmatpush2.msra.mxu0 0.0
    %716 = vmatprep.subr.mxu0 0.0
    %717 = vmatpush2.msra.mxu0 0.0
    %718 = vmatprep.subr.mxu0 0.0
    %719 = vmatpush2.msra.mxu0 0.0
    %720 = vmatprep.subr.mxu0 0.0
    %721 = vmatpush2.msra.mxu0 0.0
    %722 = vmatprep.subr.mxu0 0.0
    %723 = vmatpush2.msra.mxu0 0.0
    %724 = vmatprep.mubr.f32.mxu0 0.0
    %725 = vmatmul.mubr.f32.gmra.mxu0 %v430
    %v726 = vpop.f32.mrf.mxu0
    %v727 = vadd.f32 0.0, %v726
    %v728 = vpop.f32.mrf.mxu0
    %729 = vdwg.mxu0
    %v730 = vmul.f32 %v261, %v727
    %v731 = vadd.f32 %v656, %v730
    %v733 = vsel %vm432, %v407, 0
    %735 = vmatprep.subr.mxu0 0.0
    %736 = vmatpush1.msra.mxu0 0.0
    %737 = vmatprep.subr.mxu0 0.0
    %738 = vmatpush1.msra.mxu0 0.0
    %739 = vmatprep.subr.mxu0 0.0
    %740 = vmatpush1.msra.mxu0 0.0
    %741 = vmatprep.subr.mxu0 0.0
    %742 = vmatpush1.msra.mxu0 0.0
    %743 = vmatprep.subr.mxu0 0.0
    %744 = vmatpush1.msra.mxu0 0.0
    %745 = vmatprep.subr.mxu0 0.0
    %746 = vmatpush1.msra.mxu0 0.0
    %747 = vmatprep.subr.mxu0 0.0
    %748 = vmatpush1.msra.mxu0 0.0
    %749 = vmatprep.subr.mxu0 0.0
    %750 = vmatpush1.msra.mxu0 0.0
    %751 = vmatprep.subr.mxu0 0.0
    %752 = vmatpush1.msra.mxu0 0.0
    %753 = vmatprep.subr.mxu0 0.0
    %754 = vmatpush1.msra.mxu0 0.0
    %755 = vmatprep.subr.mxu0 0.0
    %756 = vmatpush1.msra.mxu0 0.0
    %757 = vmatprep.subr.mxu0 0.0
    %758 = vmatpush1.msra.mxu0 0.0
    %759 = vmatprep.subr.mxu0 0.0
    %760 = vmatpush1.msra.mxu0 0.0
    %761 = vmatprep.subr.mxu0 0.0
    %762 = vmatpush1.msra.mxu0 0.0
    %763 = vmatprep.subr.mxu0 0.0
    %764 = vmatpush1.msra.mxu0 0.0
    %765 = vmatprep.subr.mxu0 0.0
    %766 = vmatpush1.msra.mxu0 %v733
    %767 = vmatprep.subr.mxu0 0.0
    %768 = vmatpush2.msra.mxu0 0.0
    %769 = vmatprep.subr.mxu0 0.0
    %770 = vmatpush2.msra.mxu0 0.0
    %771 = vmatprep.subr.mxu0 0.0
    %772 = vmatpush2.msra.mxu0 0.0
    %773 = vmatprep.subr.mxu0 0.0
    %774 = vmatpush2.msra.mxu0 0.0
    %775 = vmatprep.subr.mxu0 0.0
    %776 = vmatpush2.msra.mxu0 0.0
    %777 = vmatprep.subr.mxu0 0.0
    %778 = vmatpush2.msra.mxu0 0.0
    %779 = vmatprep.subr.mxu0 0.0
    %780 = vmatpush2.msra.mxu0 0.0
    %781 = vmatprep.subr.mxu0 0.0
    %782 = vmatpush2.msra.mxu0 0.0
    %783 = vmatprep.subr.mxu0 0.0
    %784 = vmatpush2.msra.mxu0 0.0
    %785 = vmatprep.subr.mxu0 0.0
    %786 = vmatpush2.msra.mxu0 0.0
    %787 = vmatprep.subr.mxu0 0.0
    %788 = vmatpush2.msra.mxu0 0.0
    %789 = vmatprep.subr.mxu0 0.0
    %790 = vmatpush2.msra.mxu0 0.0
    %791 = vmatprep.subr.mxu0 0.0
    %792 = vmatpush2.msra.mxu0 0.0
    %793 = vmatprep.subr.mxu0 0.0
    %794 = vmatpush2.msra.mxu0 0.0
    %795 = vmatprep.subr.mxu0 0.0
    %796 = vmatpush2.msra.mxu0 0.0
    %797 = vmatprep.subr.mxu0 0.0
    %798 = vmatpush2.msra.mxu0 0.0
    %799 = vmatprep.mubr.f32.mxu0 0.0
    %800 = vmatmul.mubr.f32.gmra.mxu0 %v430
    %v801 = vpop.f32.mrf.mxu0
    %v802 = vadd.f32 0.0, %v801
    %v803 = vpop.f32.mrf.mxu0
    %804 = vdwg.mxu0
    %v805 = vmul.f32 %v330, %v802
    %v806 = vadd.f32 %v731, %v805
    %v807 = vcombine.high %v407, %v407
    %v808 = vsel %vm432, %v807, 0
    %810 = vmatprep.subr.mxu0 0.0
    %811 = vmatpush1.msra.mxu0 0.0
    %812 = vmatprep.subr.mxu0 0.0
    %813 = vmatpush1.msra.mxu0 0.0
    %814 = vmatprep.subr.mxu0 0.0
    %815 = vmatpush1.msra.mxu0 0.0
    %816 = vmatprep.subr.mxu0 0.0
    %817 = vmatpush1.msra.mxu0 0.0
    %818 = vmatprep.subr.mxu0 0.0
    %819 = vmatpush1.msra.mxu0 0.0
    %820 = vmatprep.subr.mxu0 0.0
    %821 = vmatpush1.msra.mxu0 0.0
    %822 = vmatprep.subr.mxu0 0.0
    %823 = vmatpush1.msra.mxu0 0.0
    %824 = vmatprep.subr.mxu0 0.0
    %825 = vmatpush1.msra.mxu0 0.0
    %826 = vmatprep.subr.mxu0 0.0
    %827 = vmatpush1.msra.mxu0 0.0
    %828 = vmatprep.subr.mxu0 0.0
    %829 = vmatpush1.msra.mxu0 0.0
    %830 = vmatprep.subr.mxu0 0.0
    %831 = vmatpush1.msra.mxu0 0.0
    %832 = vmatprep.subr.mxu0 0.0
    %833 = vmatpush1.msra.mxu0 0.0
    %834 = vmatprep.subr.mxu0 0.0
    %835 = vmatpush1.msra.mxu0 0.0
    %836 = vmatprep.subr.mxu0 0.0
    %837 = vmatpush1.msra.mxu0 0.0
    %838 = vmatprep.subr.mxu0 0.0
    %839 = vmatpush1.msra.mxu0 0.0
    %840 = vmatprep.subr.mxu0 0.0
    %841 = vmatpush1.msra.mxu0 %v808
    %842 = vmatprep.subr.mxu0 0.0
    %843 = vmatpush2.msra.mxu0 0.0
    %844 = vmatprep.subr.mxu0 0.0
    %845 = vmatpush2.msra.mxu0 0.0
    %846 = vmatprep.subr.mxu0 0.0
    %847 = vmatpush2.msra.mxu0 0.0
    %848 = vmatprep.subr.mxu0 0.0
    %849 = vmatpush2.msra.mxu0 0.0
    %850 = vmatprep.subr.mxu0 0.0
    %851 = vmatpush2.msra.mxu0 0.0
    %852 = vmatprep.subr.mxu0 0.0
    %853 = vmatpush2.msra.mxu0 0.0
    %854 = vmatprep.subr.mxu0 0.0
    %855 = vmatpush2.msra.mxu0 0.0
    %856 = vmatprep.subr.mxu0 0.0
    %857 = vmatpush2.msra.mxu0 0.0
    %858 = vmatprep.subr.mxu0 0.0
    %859 = vmatpush2.msra.mxu0 0.0
    %860 = vmatprep.subr.mxu0 0.0
    %861 = vmatpush2.msra.mxu0 0.0
    %862 = vmatprep.subr.mxu0 0.0
    %863 = vmatpush2.msra.mxu0 0.0
    %864 = vmatprep.subr.mxu0 0.0
    %865 = vmatpush2.msra.mxu0 0.0
    %866 = vmatprep.subr.mxu0 0.0
    %867 = vmatpush2.msra.mxu0 0.0
    %868 = vmatprep.subr.mxu0 0.0
    %869 = vmatpush2.msra.mxu0 0.0
    %870 = vmatprep.subr.mxu0 0.0
    %871 = vmatpush2.msra.mxu0 0.0
    %872 = vmatprep.subr.mxu0 0.0
    %873 = vmatpush2.msra.mxu0 0.0
    %874 = vmatprep.mubr.f32.mxu0 0.0
    %875 = vmatmul.mubr.f32.gmra.mxu0 %v430
    %v876 = vpop.f32.mrf.mxu0
    %v877 = vadd.f32 0.0, %v876
    %v878 = vpop.f32.mrf.mxu0
    %879 = vdwg.mxu0
    %v880 = vmul.f32 %v332, %v877
    %v881 = vadd.f32 %v806, %v880
    %v883 = vsel %vm432, %v408, 0
    %885 = vmatprep.subr.mxu0 0.0
    %886 = vmatpush1.msra.mxu0 0.0
    %887 = vmatprep.subr.mxu0 0.0
    %888 = vmatpush1.msra.mxu0 0.0
    %889 = vmatprep.subr.mxu0 0.0
    %890 = vmatpush1.msra.mxu0 0.0
    %891 = vmatprep.subr.mxu0 0.0
    %892 = vmatpush1.msra.mxu0 0.0
    %893 = vmatprep.subr.mxu0 0.0
    %894 = vmatpush1.msra.mxu0 0.0
    %895 = vmatprep.subr.mxu0 0.0
    %896 = vmatpush1.msra.mxu0 0.0
    %897 = vmatprep.subr.mxu0 0.0
    %898 = vmatpush1.msra.mxu0 0.0
    %899 = vmatprep.subr.mxu0 0.0
    %900 = vmatpush1.msra.mxu0 0.0
    %901 = vmatprep.subr.mxu0 0.0
    %902 = vmatpush1.msra.mxu0 0.0
    %903 = vmatprep.subr.mxu0 0.0
    %904 = vmatpush1.msra.mxu0 0.0
    %905 = vmatprep.subr.mxu0 0.0
    %906 = vmatpush1.msra.mxu0 0.0
    %907 = vmatprep.subr.mxu0 0.0
    %908 = vmatpush1.msra.mxu0 0.0
    %909 = vmatprep.subr.mxu0 0.0
    %910 = vmatpush1.msra.mxu0 0.0
    %911 = vmatprep.subr.mxu0 0.0
    %912 = vmatpush1.msra.mxu0 0.0
    %913 = vmatprep.subr.mxu0 0.0
    %914 = vmatpush1.msra.mxu0 0.0
    %915 = vmatprep.subr.mxu0 0.0
    %916 = vmatpush1.msra.mxu0 %v883
    %917 = vmatprep.subr.mxu0 0.0
    %918 = vmatpush2.msra.mxu0 0.0
    %919 = vmatprep.subr.mxu0 0.0
    %920 = vmatpush2.msra.mxu0 0.0
    %921 = vmatprep.subr.mxu0 0.0
    %922 = vmatpush2.msra.mxu0 0.0
    %923 = vmatprep.subr.mxu0 0.0
    %924 = vmatpush2.msra.mxu0 0.0
    %925 = vmatprep.subr.mxu0 0.0
    %926 = vmatpush2.msra.mxu0 0.0
    %927 = vmatprep.subr.mxu0 0.0
    %928 = vmatpush2.msra.mxu0 0.0
    %929 = vmatprep.subr.mxu0 0.0
    %930 = vmatpush2.msra.mxu0 0.0
    %931 = vmatprep.subr.mxu0 0.0
    %932 = vmatpush2.msra.mxu0 0.0
    %933 = vmatprep.subr.mxu0 0.0
    %934 = vmatpush2.msra.mxu0 0.0
    %935 = vmatprep.subr.mxu0 0.0
    %936 = vmatpush2.msra.mxu0 0.0
    %937 = vmatprep.subr.mxu0 0.0
    %938 = vmatpush2.msra.mxu0 0.0
    %939 = vmatprep.subr.mxu0 0.0
    %940 = vmatpush2.msra.mxu0 0.0
    %941 = vmatprep.subr.mxu0 0.0
    %942 = vmatpush2.msra.mxu0 0.0
    %943 = vmatprep.subr.mxu0 0.0
    %944 = vmatpush2.msra.mxu0 0.0
    %945 = vmatprep.subr.mxu0 0.0
    %946 = vmatpush2.msra.mxu0 0.0
    %947 = vmatprep.subr.mxu0 0.0
    %948 = vmatpush2.msra.mxu0 0.0
    %949 = vmatprep.mubr.f32.mxu0 0.0
    %950 = vmatmul.mubr.f32.gmra.mxu0 %v430
    %v951 = vpop.f32.mrf.mxu0
    %v952 = vadd.f32 0.0, %v951
    %v953 = vpop.f32.mrf.mxu0
    %954 = vdwg.mxu0
    %v955 = vmul.f32 %v401, %v952
    %v956 = vadd.f32 %v881, %v955
    %v957 = vcombine.high %v408, %v408
    %v958 = vsel %vm432, %v957, 0
    %960 = vmatprep.subr.mxu0 0.0
    %961 = vmatpush1.msra.mxu0 0.0
    %962 = vmatprep.subr.mxu0 0.0
    %963 = vmatpush1.msra.mxu0 0.0
    %964 = vmatprep.subr.mxu0 0.0
    %965 = vmatpush1.msra.mxu0 0.0
    %966 = vmatprep.subr.mxu0 0.0
    %967 = vmatpush1.msra.mxu0 0.0
    %968 = vmatprep.subr.mxu0 0.0
    %969 = vmatpush1.msra.mxu0 0.0
    %970 = vmatprep.subr.mxu0 0.0
    %971 = vmatpush1.msra.mxu0 0.0
    %972 = vmatprep.subr.mxu0 0.0
    %973 = vmatpush1.msra.mxu0 0.0
    %974 = vmatprep.subr.mxu0 0.0
    %975 = vmatpush1.msra.mxu0 0.0
    %976 = vmatprep.subr.mxu0 0.0
    %977 = vmatpush1.msra.mxu0 0.0
    %978 = vmatprep.subr.mxu0 0.0
    %979 = vmatpush1.msra.mxu0 0.0
    %980 = vmatprep.subr.mxu0 0.0
    %981 = vmatpush1.msra.mxu0 0.0
    %982 = vmatprep.subr.mxu0 0.0
    %983 = vmatpush1.msra.mxu0 0.0
    %984 = vmatprep.subr.mxu0 0.0
    %985 = vmatpush1.msra.mxu0 0.0
    %986 = vmatprep.subr.mxu0 0.0
    %987 = vmatpush1.msra.mxu0 0.0
    %988 = vmatprep.subr.mxu0 0.0
    %989 = vmatpush1.msra.mxu0 0.0
    %990 = vmatprep.subr.mxu0 0.0
    %991 = vmatpush1.msra.mxu0 %v958
    %992 = vmatprep.subr.mxu0 0.0
    %993 = vmatpush2.msra.mxu0 0.0
    %994 = vmatprep.subr.mxu0 0.0
    %995 = vmatpush2.msra.mxu0 0.0
    %996 = vmatprep.subr.mxu0 0.0
    %997 = vmatpush2.msra.mxu0 0.0
    %998 = vmatprep.subr.mxu0 0.0
    %999 = vmatpush2.msra.mxu0 0.0
    %1000 = vmatprep.subr.mxu0 0.0
    %1001 = vmatpush2.msra.mxu0 0.0
    %1002 = vmatprep.subr.mxu0 0.0
    %1003 = vmatpush2.msra.mxu0 0.0
    %1004 = vmatprep.subr.mxu0 0.0
    %1005 = vmatpush2.msra.mxu0 0.0
    %1006 = vmatprep.subr.mxu0 0.0
    %1007 = vmatpush2.msra.mxu0 0.0
    %1008 = vmatprep.subr.mxu0 0.0
    %1009 = vmatpush2.msra.mxu0 0.0
    %1010 = vmatprep.subr.mxu0 0.0
    %1011 = vmatpush2.msra.mxu0 0.0
    %1012 = vmatprep.subr.mxu0 0.0
    %1013 = vmatpush2.msra.mxu0 0.0
    %1014 = vmatprep.subr.mxu0 0.0
    %1015 = vmatpush2.msra.mxu0 0.0
    %1016 = vmatprep.subr.mxu0 0.0
    %1017 = vmatpush2.msra.mxu0 0.0
    %1018 = vmatprep.subr.mxu0 0.0
    %1019 = vmatpush2.msra.mxu0 0.0
    %1020 = vmatprep.subr.mxu0 0.0
    %1021 = vmatpush2.msra.mxu0 0.0
    %1022 = vmatprep.subr.mxu0 0.0
    %1023 = vmatpush2.msra.mxu0 0.0
    %1024 = vmatprep.mubr.f32.mxu0 0.0
    %1025 = vmatmul.mubr.f32.gmra.mxu0 %v430
    %v1026 = vpop.f32.mrf.mxu0
    %v1027 = vadd.f32 0.0, %v1026
    %v1028 = vpop.f32.mrf.mxu0
    %1029 = vdwg.mxu0
    %v1030 = vmul.f32 %v403, %v1027
    %v1031 = vadd.f32 %v956, %v1030
    %1032 = vst [vmem:[#allocation8] sm:$0xff] %v1031
    // Predicated region
    $region26: #{tpu_custom_call.1} parent=1 // pred_check
      _
    $region27: #{tpu_custom_call.1} parent=1 // pred_check_branch
      %1034 = sbr.rel (0) target = $region29
    $region28: #{tpu_custom_call.1} parent=1 // pred_region
      %s1036 = ssub.s32 128, 128
      %1037 = vsyncadd [#allocation4], %s1036
      %s1039 = sshll.u32 [#allocation8], 4
      %s1040 = int_to_ptr.vmem [resolvable:$true] %s1039
      %1042 = dma.vmem_to_hbm [thread:$0]  %s1040, 128, %s3, [#allocation4]
    $region29: #{tpu_custom_call.1} parent=1 // pred_fallthru
      _
    // Predicated region
    $region30: #{tpu_custom_call.1} parent=1 // pred_check
      _
    $region31: #{tpu_custom_call.1} parent=1 // pred_check_branch
      %1044 = sbr.rel (0) target = $region33
    $region32: #{tpu_custom_call.1} parent=1 // pred_region
      %1045 = dma.done [#allocation4], 128
    $region33: #{tpu_custom_call.1} parent=1 // pred_fallthru
      _
    %1046 = vsyncpa [#allocation3], 1
    %1047 = vsyncpa [#allocation6], 1
    %1048 = vsyncpa [#allocation4], 1

</llo_original>
